<compile_context>
chip_gen: v7x
topology: tpu7x:2x2x1
jax: 0.10.0
libtpu: 0.0.40
codegen_flags: <defaults>
</compile_context>

<pallas_src>
import functools
import math

import jax
import jax.numpy as jnp
from jax import lax
from jax.experimental import pallas as pl
from jax.experimental.pallas import tpu as pltpu


def _posenc_fused_kernel(wf_ref, bf_ref, out_ref, *, tm, d_model):
    """One T-tile: build pe rows in-kernel, single fused bf16 matmul, f32 bias."""
    i = pl.program_id(0)
    row0 = (i * tm).astype(jnp.float32)

    # Reconstruct the sin/cos table for rows [i*tm, i*tm + tm).
    pos = lax.broadcasted_iota(jnp.int32, (tm, d_model), 0).astype(jnp.float32) + row0
    col = lax.broadcasted_iota(jnp.int32, (tm, d_model), 1)
    even_col = (col - (col & 1)).astype(jnp.float32)           # 2*floor(c/2)
    inv_freq = jnp.exp(even_col * (-math.log(10000.0) / d_model))   # EUP
    angle = pos * inv_freq
    pe = jnp.where((col & 1) == 0, jnp.sin(angle), jnp.cos(angle))  # f32, (tm, D)

    # Single fused matmul on the MXU: bf16 inputs, f32 accumulation.
    h = jnp.dot(pe.astype(jnp.bfloat16), wf_ref[...],
                preferred_element_type=jnp.float32)
    # Bias add kept in f32 (v5e VPU has no bf16).
    out_ref[...] = (h + bf_ref[...]).astype(out_ref.dtype)


def fuse_linears(wb_t, bb, wc_t, bc):
    """Fold Linear_c(Linear_b(x)) into a single affine map (host-side, once).

    wb_t/wc_t are stored as (d_in, d_out) == W^T, so:
      out = (x @ wb_t + bb) @ wc_t + bc = x @ (wb_t @ wc_t) + (bb @ wc_t + bc)
    """
    w_fused = wb_t @ wc_t                        # (D, D) f32
    b_fused = bb @ wc_t + bc                     # (1, D) f32
    return w_fused.astype(jnp.bfloat16), b_fused.astype(jnp.float32)


def positional_encoding_forward(seq_len, w_fused, b_fused, *, block_t=512):
    """seq_len = t.size(0); w_fused: (D, D) bf16; b_fused: (1, D) f32.
    Returns (seq_len, D) f32 == Linear_c(Linear_b(pe[:seq_len]))."""
    d_model = w_fused.shape[0]

    # Pad rows to a multiple of 8 (sublane granularity) and tile T.
    t_pad = ((seq_len + 7) // 8) * 8
    tm = min(block_t, t_pad)
    num_tiles = pl.cdiv(t_pad, tm)
    padded_t = num_tiles * tm

    kernel = functools.partial(_posenc_fused_kernel, tm=tm, d_model=d_model)

    out = pl.pallas_call(
        kernel,
        out_shape=jax.ShapeDtypeStruct((padded_t, d_model), jnp.float32),
        grid_spec=pltpu.PrefetchScalarGridSpec(
            num_scalar_prefetch=0,
            grid=(num_tiles,),
            in_specs=[
                # Fused weight / bias stay at block (0,0): VMEM-resident across tiles.
                pl.BlockSpec((d_model, d_model), lambda i: (0, 0)),
                pl.BlockSpec((1, d_model), lambda i: (0, 0)),
            ],
            out_specs=pl.BlockSpec((tm, d_model), lambda i: (i, 0)),
        ),
        compiler_params=pltpu.CompilerParams(
            # Independent T tiles: shard across v7x's two TensorCores.
            dimension_semantics=("parallel",),
        ),
    )(w_fused, b_fused)

    return out[:seq_len]


def build_pe_table(max_len, d_model):
    """Exact reproduction of the PyTorch sin/cos table (reference only)."""
    position = jnp.arange(max_len, dtype=jnp.float32)[:, None]
    div_term = jnp.exp(
        jnp.arange(0, d_model, 2, dtype=jnp.float32)
        * (-math.log(10000.0) / d_model)
    )
    pe = jnp.zeros((max_len, d_model), dtype=jnp.float32)
    pe = pe.at[:, 0::2].set(jnp.sin(position * div_term))
    pe = pe.at[:, 1::2].set(jnp.cos(position * div_term))
    return pe


def init_linear_params(key, d_in, d_out):
    """Deterministic nn.Linear-style init (uniform +/- 1/sqrt(fan_in))."""
    kw, kb = jax.random.split(key)
    bound = 1.0 / math.sqrt(d_in)
    # Stored as (d_in, d_out) == W^T so matmuls are plain row-major x @ W^T.
    w_t = jax.random.uniform(kw, (d_in, d_out), jnp.float32, -bound, bound)
    b = jax.random.uniform(kb, (1, d_out), jnp.float32, -bound, bound)
    return w_t, b


if __name__ == "__main__":
    d_model = 256
    max_len = 64          # small synthetic table (module default is 5000)
    T = 8                 # t.size(0)

    key = jax.random.PRNGKey(0)
    k_b, k_c, k_t = jax.random.split(key, 3)

    wb_t, bb = init_linear_params(k_b, d_model, d_model)
    wc_t, bc = init_linear_params(k_c, d_model, d_model)

    # Host-side one-time fusion of the two Linears (bf16 weight, f32 bias).
    w_fused, b_fused = fuse_linears(wb_t, bb, wc_t, bc)

    # 't' is only used for its leading dimension in the PyTorch forward.
    t = jax.random.normal(k_t, (T, d_model), jnp.float32)

    out = positional_encoding_forward(t.shape[0], w_fused, b_fused)
    out = jax.block_until_ready(out)

    # Reference in plain f32 JAX: exact unfused two-Linear forward.
    pe = build_pe_table(max_len, d_model)
    pe_slice = pe[:T]
    ref = (pe_slice @ wb_t + bb) @ wc_t + bc

    assert out.shape == (T, d_model)
    # bf16 matmul inputs + fused-weight rounding => loosen tolerance vs pure f32.
    assert jnp.allclose(out, ref, atol=2e-2, rtol=2e-2), (
        float(jnp.max(jnp.abs(out - ref)))
    )

    print("KERNEL_OK")
</pallas_src>

<mosaic_0001>
module attributes {stable_mosaic.version = 11 : i64} {
  func.func @_posenc_fused_kernel(%arg0: i32, %arg1: memref<256x256xbf16, #tpu.memory_space<vmem>>, %arg2: memref<1x256xf32, #tpu.memory_space<vmem>>, %arg3: memref<8x256xf32, #tpu.memory_space<vmem>>) attributes {dimension_semantics = [#tpu.dimension_semantics<parallel>], iteration_bounds = array<i64: 1>, scalar_prefetch = 0 : i64, scratch_operands = 0 : i64, tpu.core_type = #tpu.core_type<tc>, window_params = [{pipeline_mode = #tpu.pipeline_mode<synchronous>, transform_indices = @transform_0, window_bounds = array<i64: 256, 256>}, {pipeline_mode = #tpu.pipeline_mode<synchronous>, transform_indices = @transform_1, window_bounds = array<i64: 1, 256>}, {transform_indices = @transform_2, window_bounds = array<i64: 8, 256>}]} {
    %c8_i32 = arith.constant 8 : i32
    %0 = arith.muli %arg0, %c8_i32 : i32
    %1 = arith.sitofp %0 : i32 to f32
    %2 = tpu.iota {dimensions = array<i32: 0>} : vector<8x256xi32>
    %3 = arith.sitofp %2 : vector<8x256xi32> to vector<8x256xf32>
    %4 = vector.broadcast %1 : f32 to vector<8x256xf32>
    %5 = arith.addf %3, %4 : vector<8x256xf32>
    %6 = tpu.iota {dimensions = array<i32: 1>} : vector<8x256xi32>
    %c1_i32 = arith.constant 1 : i32
    %7 = vector.broadcast %c1_i32 : i32 to vector<8x256xi32>
    %8 = arith.andi %6, %7 : vector<8x256xi32>
    %9 = arith.subi %6, %8 : vector<8x256xi32>
    %10 = arith.sitofp %9 : vector<8x256xi32> to vector<8x256xf32>
    %cst = arith.constant -0.0359778926 : f32
    %11 = vector.broadcast %cst : f32 to vector<8x256xf32>
    %12 = arith.mulf %10, %11 : vector<8x256xf32>
    %13 = math.exp %12 : vector<8x256xf32>
    %14 = arith.mulf %5, %13 : vector<8x256xf32>
    %c1_i32_0 = arith.constant 1 : i32
    %15 = vector.broadcast %c1_i32_0 : i32 to vector<8x256xi32>
    %16 = arith.andi %6, %15 : vector<8x256xi32>
    %c0_i32 = arith.constant 0 : i32
    %17 = vector.broadcast %c0_i32 : i32 to vector<8x256xi32>
    %18 = arith.cmpi eq, %16, %17 : vector<8x256xi32>
    %19 = math.sin %14 : vector<8x256xf32>
    %20 = math.cos %14 : vector<8x256xf32>
    %21 = arith.select %18, %19, %20 : vector<8x256xi1>, vector<8x256xf32>
    %22 = arith.truncf %21 : vector<8x256xf32> to vector<8x256xbf16>
    %c0 = arith.constant 0 : index
    %c0_1 = arith.constant 0 : index
    %23 = vector.load %arg1[%c0, %c0_1] : memref<256x256xbf16, #tpu.memory_space<vmem>>, vector<256x256xbf16>
    %cst_2 = arith.constant dense<0.000000e+00> : vector<8x256xf32>
    %24 = tpu.matmul %22, %23, %cst_2 {dimension_numbers = #tpu.dot_dimension_numbers<[1], [0], [0], [1], [0, 0, 1, 1], [], []>} : vector<8x256xbf16>, vector<256x256xbf16>, vector<8x256xf32> -> vector<8x256xf32>
    %c0_3 = arith.constant 0 : index
    %c0_4 = arith.constant 0 : index
    %25 = vector.load %arg2[%c0_3, %c0_4] : memref<1x256xf32, #tpu.memory_space<vmem>>, vector<1x256xf32>
    %26 = vector.broadcast %25 : vector<1x256xf32> to vector<8x256xf32>
    %27 = arith.addf %24, %26 : vector<8x256xf32>
    %c0_5 = arith.constant 0 : index
    %c0_6 = arith.constant 0 : index
    %28 = vector.load %arg3[%c0_5, %c0_6] : memref<8x256xf32, #tpu.memory_space<vmem>>, vector<8x256xf32>
    tpu.vector_store %arg3[%c0_5, %c0_6], %27 {strides = array<i32>} : memref<8x256xf32, #tpu.memory_space<vmem>>, vector<8x256xf32>,
    return
  }
  func.func @transform_0(%arg0: i32) -> (i32, i32) {
    %c0_i32 = arith.constant 0 : i32
    %c0_i32_0 = arith.constant 0 : i32
    %c0_i32_1 = arith.constant 0 : i32
    return %c0_i32, %c0_i32_0 : i32, i32
  }
  func.func @transform_1(%arg0: i32) -> (i32, i32) {
    %c0_i32 = arith.constant 0 : i32
    %c0_i32_0 = arith.constant 0 : i32
    %c0_i32_1 = arith.constant 0 : i32
    return %c0_i32, %c0_i32_0 : i32, i32
  }
  func.func @transform_2(%arg0: i32) -> (i32, i32) {
    %c0_i32 = arith.constant 0 : i32
    %c0_i32_0 = arith.constant 0 : i32
    return %arg0, %c0_i32 : i32, i32
  }
}

</mosaic_0001>

<llo_original>
// kernel: tpu_custom_call.1
$region0: #{tpu_custom_call.1}
  #allocation0 [shape = 'u32[]', space=smem, size = 0x4, offset = 0x4, fixed_abs, tag = 'smem constant byte address 0x4 - core index']
  #allocation1 [shape = 'u32[144,128]{1,0:T(1,128)}', space=vmem, size = 0x12000, scoped, tag = 'internal scratch']
  %s0 = inlined_call_operand.hbm [shape: bf16[256,256], index: 0, kind: input, shape index: {}]
  %s1 = inlined_call_operand.vmem [shape: f32[1,256], index: 1, kind: input, shape index: {}]
  %s2 = inlined_call_operand.hbm [shape: f32[8,256], index: 2, kind: output, shape index: {}]
  %s3 = sld [smem:[#allocation0]]
  $region22: #{tpu_custom_call.1} parent=0
    _
  %s5 = ssub.s32 1, %s3
  %s6 = scalar_select 0, %s5, %s3
  $region1: #{tpu_custom_call.1} parent=0
    #allocation2 [shape = 'u8[131072]{0}', space=vmem, size = 0x20000, scoped, tag = 'input window, operand 0, single buffered']
    #allocation3 [shape = 's32[1]{0}', space=sflag, size = 0x4, scoped, tag = 'scoped memory for tpu_custom_call.1']
    #allocation4 [shape = 's32[1]{0}', space=sflag, size = 0x4, scoped, tag = 'scoped memory for tpu_custom_call.1']
    #allocation5 [shape = 'u8[8192]{0}', space=vmem, size = 0x2000, scoped, tag = 'output window, operand 0, single buffered']
    %7 = vsyncpa [#allocation3], 0
    %8 = vsyncpa [#allocation4], 0
    // Predicated region
    $region2: #{tpu_custom_call.1} parent=1 // pred_check
      _
    $region3: #{tpu_custom_call.1} parent=1 // pred_check_branch
      %10 = sbr.rel (0) target = $region5
    $region4: #{tpu_custom_call.1} parent=1 // pred_region
      %s12 = ssub.s32 4096, 4096
      %13 = vsyncadd [#allocation3], %s12
      %s14 = sshll.u32 [#allocation2], 4
      %s15 = int_to_ptr.vmem [resolvable:$true] %s14
      %20 = dma.hbm_to_vmem [thread:$0]  %s0, 4096, %s15, [#allocation3], 128, 128, 8
    $region5: #{tpu_custom_call.1} parent=1 // pred_fallthru
      _
    // Predicated region
    $region6: #{tpu_custom_call.1} parent=1 // pred_check
      _
    $region7: #{tpu_custom_call.1} parent=1 // pred_check_branch
      %22 = sbr.rel (0) target = $region9
    $region8: #{tpu_custom_call.1} parent=1 // pred_region
      _
    $region9: #{tpu_custom_call.1} parent=1 // pred_fallthru
      _
    // Predicated region
    $region10: #{tpu_custom_call.1} parent=1 // pred_check
      _
    $region11: #{tpu_custom_call.1} parent=1 // pred_check_branch
      %24 = sbr.rel (0) target = $region13
    $region12: #{tpu_custom_call.1} parent=1 // pred_region
      %25 = dma.done [#allocation3], 4096
    $region13: #{tpu_custom_call.1} parent=1 // pred_fallthru
      _
    %s26 = smul.u32 0, 8
    %s27 = scvt.s32.f32 %s26
    %v28 = vlaneseq
    %v29 = vshrl.u32 %v28, 7
    %v30 = vcvt.s32.f32 %v29
    %v31 = vstv %s27
    %v32 = vadd.f32 %v30, %v31
    %v33 = vlaneseq
    %v34 = vand.u32 %v33, 127
    %v35 = vadd.s32 %v34, 128
    %v36 = vand.u32 %v34, 1
    %v37 = vand.u32 %v35, 1
    %v38 = vsub.s32 %v34, %v36
    %v39 = vsub.s32 %v35, %v37
    %v40 = vcvt.s32.f32 %v38
    %v41 = vcvt.s32.f32 %v39
    %v42 = vmul.f32 %v40, -0.035977893
    %v43 = vmul.f32 %v41, -0.035977893
    %v44 = vmul.f32 %v42, 1.442695
    %v45 = vpow.pop %v44
    %v46 = vmul.f32 %v43, 1.442695
    %v47 = vpow.pop %v46
    %v48 = vmul.f32 %v32, %v45
    %v49 = vmul.f32 %v32, %v47
    %vm50 = vcmp.eq.s32.totalorder %v36, 0
    %vm51 = vcmp.eq.s32.totalorder %v37, 0
    %v52 = vand.u32 2147483647, %v48
    %vm53 = vcmp.le.f32.partialorder %v52, 0.7853982
    %vm54 = vcmp.lt.s32.totalorder %v48, 0
    %v55 = vand.u32 %v48, 2139095040
    %v56 = vshrl.u32 %v55, 23
    %v57 = vsub.s32 %v56, 127
    %v58 = vand.u32 2147483647, %v48
    %v59 = vand.u32 %v58, 8388607
    %v60 = vor.u32 %v59, 8388608
    %v61 = vsub.s32 0, %v60
    %v62 = vadd.s32 %v57, 1
    %vm63 = vcmp.gt.s32.totalorder %v62, 0
    %v64 = vsel %vm63, %v62, 0
    %v65 = vshrl.u32 %v64, 5
    %v66 = vand.u32 %v64, 31
    %v67 = vsub.s32 32, %v66
    %v68 = vshrl.u32 683565275, %v67
    %v69 = vshll.u32 683565275, %v66
    %v70 = vshrl.u32 2475754826, %v67
    %v71 = vor.u32 %v69, %v70
    %v72 = vshll.u32 2475754826, %v66
    %v73 = vshrl.u32 2131351028, %v67
    %v74 = vor.u32 %v72, %v73
    %v75 = vshll.u32 2131351028, %v66
    %v76 = vshrl.u32 2102212464, %v67
    %v77 = vor.u32 %v75, %v76
    %v78 = vshll.u32 2102212464, %v66
    %v79 = vshrl.u32 920167782, %v67
    %v80 = vor.u32 %v78, %v79
    %v81 = vshll.u32 920167782, %v66
    %v82 = vshrl.u32 1326507024, %v67
    %v83 = vor.u32 %v81, %v82
    %vm84 = vcmp.lt.s32.totalorder %v65, 1
    %vm85 = vcmp.lt.s32.totalorder %v65, 2
    %vm86 = vcmp.lt.s32.totalorder %v65, 3
    %vm87 = vcmp.lt.s32.totalorder %v65, 4
    %v88 = vsel %vm84, %v68, %v71
    %v89 = vsel %vm87, %v77, 2102212464
    %v90 = vsel %vm86, %v74, %v89
    %v91 = vsel %vm85, %v88, %v90
    %v92 = vsel %vm84, %v71, %v74
    %v93 = vsel %vm87, %v80, 920167782
    %v94 = vsel %vm86, %v77, %v93
    %v95 = vsel %vm85, %v92, %v94
    %v96 = vsel %vm84, %v74, %v77
    %v97 = vsel %vm87, %v83, 1326507024
    %v98 = vsel %vm86, %v80, %v97
    %v99 = vsel %vm85, %v96, %v98
    %v100 = vshll.u32 %v60, 8
    %v101 = vmul.u32.u64.compose %v100, %v99
    %v102 = vextract.low.u32 %v101
    %v103 = vextract.high.u32 %v101
    %v104 = vmul.u32.u64.compose %v100, %v95
    %v105 = vextract.low.u32 %v104
    %v106 = vextract.high.u32 %v104
    %v107 = vmul.u32 %v100, %v91
    %v108 = vadd.s32 %v103, %v105
    %vm109 = vc.u32 %v103, %v105
    %v110 = vadd.s32 %v106, 1
    %v111 = vsel %vm109, %v110, %v106
    %v112 = vadd.s32 %v107, %v111
    %v113 = vadd.s32 %v112, 536870912
    %v114 = vshrl.u32 %v113, 30
    %v115 = vshll.u32 %v114, 30
    %v116 = vsub.s32 %v112, %v115
    %vm117 = vcmp.lt.s32.totalorder %v116, 0
    %v118 = vsub.s32 0, %v116
    %v119 = vsel %vm117, %v118, %v116
    %v120 = vclz %v119
    %v121 = vsub.s32 %v120, 2
    %vm122 = vcmp.gt.s32.totalorder 0, %v121
    %v123 = vsel %vm122, 0, %v121
    %v124 = vsub.s32 32, %v123
    %v125 = vshll.u32 %v116, %v123
    %v126 = vshrl.u32 %v108, %v124
    %v127 = vor.u32 %v125, %v126
    %v128 = vsub.s32 4294967266, %v123
    %v129 = vadd.s32 %v128, 127
    %v130 = vshll.u32 %v129, 23
    %v131 = vor.u32 4788187, %v130
    %v132 = vand.u32 2147483647, %v131
    %v134 = vcvt.s32.f32 %v127
    %v135 = vmul.f32 %v134, %v132
    %v136 = vxor.u32 %v135, 2147483648
    %v137 = vsel %vm54, %v136, %v135
    %v138 = vsub.s32 4, %v114
    %v139 = vsel %vm54, %v138, %v114
    %v140 = vsel %vm53, %v48, %v137
    %v141 = vsel %vm53, 0, %v139
    %v142 = vcosq.f32.pop %v140
    %v143 = vsinq.f32.pop %v140
    %vm144 = vweird.f32 %v48
    %v145 = vadd.s32 %v141, 3
    %v146 = vand.u32 %v145, 3
    %vm147 = vcmp.lt.s32.totalorder %v146, 2
    %vm148 = vcmp.eq.s32.totalorder %v146, 0
    %v149 = vxor.u32 %v143, 2147483648
    %v150 = vsel %vm148, %v142, %v149
    %vm151 = vcmp.eq.s32.totalorder %v146, 2
    %v152 = vxor.u32 %v142, 2147483648
    %v153 = vsel %vm151, %v152, %v143
    %v154 = vsel %vm147, %v150, %v153
    %v155 = vsel %vm144, nan, %v154
    %v156 = vand.u32 2147483647, %v49
    %vm157 = vcmp.le.f32.partialorder %v156, 0.7853982
    %vm158 = vcmp.lt.s32.totalorder %v49, 0
    %v159 = vand.u32 %v49, 2139095040
    %v160 = vshrl.u32 %v159, 23
    %v161 = vsub.s32 %v160, 127
    %v162 = vand.u32 2147483647, %v49
    %v163 = vand.u32 %v162, 8388607
    %v164 = vor.u32 %v163, 8388608
    %v165 = vsub.s32 0, %v164
    %v166 = vadd.s32 %v161, 1
    %vm167 = vcmp.gt.s32.totalorder %v166, 0
    %v168 = vsel %vm167, %v166, 0
    %v169 = vshrl.u32 %v168, 5
    %v170 = vand.u32 %v168, 31
    %v171 = vsub.s32 32, %v170
    %v172 = vshrl.u32 683565275, %v171
    %v173 = vshll.u32 683565275, %v170
    %v174 = vshrl.u32 2475754826, %v171
    %v175 = vor.u32 %v173, %v174
    %v176 = vshll.u32 2475754826, %v170
    %v177 = vshrl.u32 2131351028, %v171
    %v178 = vor.u32 %v176, %v177
    %v179 = vshll.u32 2131351028, %v170
    %v180 = vshrl.u32 2102212464, %v171
    %v181 = vor.u32 %v179, %v180
    %v182 = vshll.u32 2102212464, %v170
    %v183 = vshrl.u32 920167782, %v171
    %v184 = vor.u32 %v182, %v183
    %v185 = vshll.u32 920167782, %v170
    %v186 = vshrl.u32 1326507024, %v171
    %v187 = vor.u32 %v185, %v186
    %vm188 = vcmp.lt.s32.totalorder %v169, 1
    %vm189 = vcmp.lt.s32.totalorder %v169, 2
    %vm190 = vcmp.lt.s32.totalorder %v169, 3
    %vm191 = vcmp.lt.s32.totalorder %v169, 4
    %v192 = vsel %vm188, %v172, %v175
    %v193 = vsel %vm191, %v181, 2102212464
    %v194 = vsel %vm190, %v178, %v193
    %v195 = vsel %vm189, %v192, %v194
    %v196 = vsel %vm188, %v175, %v178
    %v197 = vsel %vm191, %v184, 920167782
    %v198 = vsel %vm190, %v181, %v197
    %v199 = vsel %vm189, %v196, %v198
    %v200 = vsel %vm188, %v178, %v181
    %v201 = vsel %vm191, %v187, 1326507024
    %v202 = vsel %vm190, %v184, %v201
    %v203 = vsel %vm189, %v200, %v202
    %v204 = vshll.u32 %v164, 8
    %v205 = vmul.u32.u64.compose %v204, %v203
    %v206 = vextract.low.u32 %v205
    %v207 = vextract.high.u32 %v205
    %v208 = vmul.u32.u64.compose %v204, %v199
    %v209 = vextract.low.u32 %v208
    %v210 = vextract.high.u32 %v208
    %v211 = vmul.u32 %v204, %v195
    %v212 = vadd.s32 %v207, %v209
    %vm213 = vc.u32 %v207, %v209
    %v214 = vadd.s32 %v210, 1
    %v215 = vsel %vm213, %v214, %v210
    %v216 = vadd.s32 %v211, %v215
    %v217 = vadd.s32 %v216, 536870912
    %v218 = vshrl.u32 %v217, 30
    %v219 = vshll.u32 %v218, 30
    %v220 = vsub.s32 %v216, %v219
    %vm221 = vcmp.lt.s32.totalorder %v220, 0
    %v222 = vsub.s32 0, %v220
    %v223 = vsel %vm221, %v222, %v220
    %v224 = vclz %v223
    %v225 = vsub.s32 %v224, 2
    %vm226 = vcmp.gt.s32.totalorder 0, %v225
    %v227 = vsel %vm226, 0, %v225
    %v228 = vsub.s32 32, %v227
    %v229 = vshll.u32 %v220, %v227
    %v230 = vshrl.u32 %v212, %v228
    %v231 = vor.u32 %v229, %v230
    %v232 = vsub.s32 4294967266, %v227
    %v233 = vadd.s32 %v232, 127
    %v234 = vshll.u32 %v233, 23
    %v235 = vor.u32 4788187, %v234
    %v236 = vand.u32 2147483647, %v235
    %v238 = vcvt.s32.f32 %v231
    %v239 = vmul.f32 %v238, %v236
    %v240 = vxor.u32 %v239, 2147483648
    %v241 = vsel %vm158, %v240, %v239
    %v242 = vsub.s32 4, %v218
    %v243 = vsel %vm158, %v242, %v218
    %v244 = vsel %vm157, %v49, %v241
    %v245 = vsel %vm157, 0, %v243
    %v246 = vcosq.f32.pop %v244
    %v247 = vsinq.f32.pop %v244
    %vm248 = vweird.f32 %v49
    %v249 = vadd.s32 %v245, 3
    %v250 = vand.u32 %v249, 3
    %vm251 = vcmp.lt.s32.totalorder %v250, 2
    %vm252 = vcmp.eq.s32.totalorder %v250, 0
    %v253 = vxor.u32 %v247, 2147483648
    %v254 = vsel %vm252, %v246, %v253
    %vm255 = vcmp.eq.s32.totalorder %v250, 2
    %v256 = vxor.u32 %v246, 2147483648
    %v257 = vsel %vm255, %v256, %v247
    %v258 = vsel %vm251, %v254, %v257
    %v259 = vsel %vm248, nan, %v258
    %v260 = vand.u32 2147483647, %v48
    %vm261 = vcmp.le.f32.partialorder %v260, 0.7853982
    %vm262 = vcmp.lt.s32.totalorder %v48, 0
    %v263 = vand.u32 %v48, 2139095040
    %v264 = vshrl.u32 %v263, 23
    %v265 = vsub.s32 %v264, 127
    %v266 = vand.u32 2147483647, %v48
    %v267 = vand.u32 %v266, 8388607
    %v268 = vor.u32 %v267, 8388608
    %v269 = vsub.s32 0, %v268
    %v270 = vadd.s32 %v265, 1
    %vm271 = vcmp.gt.s32.totalorder %v270, 0
    %v272 = vsel %vm271, %v270, 0
    %v273 = vshrl.u32 %v272, 5
    %v274 = vand.u32 %v272, 31
    %v275 = vsub.s32 32, %v274
    %v276 = vshrl.u32 683565275, %v275
    %v277 = vshll.u32 683565275, %v274
    %v278 = vshrl.u32 2475754826, %v275
    %v279 = vor.u32 %v277, %v278
    %v280 = vshll.u32 2475754826, %v274
    %v281 = vshrl.u32 2131351028, %v275
    %v282 = vor.u32 %v280, %v281
    %v283 = vshll.u32 2131351028, %v274
    %v284 = vshrl.u32 2102212464, %v275
    %v285 = vor.u32 %v283, %v284
    %v286 = vshll.u32 2102212464, %v274
    %v287 = vshrl.u32 920167782, %v275
    %v288 = vor.u32 %v286, %v287
    %v289 = vshll.u32 920167782, %v274
    %v290 = vshrl.u32 1326507024, %v275
    %v291 = vor.u32 %v289, %v290
    %vm292 = vcmp.lt.s32.totalorder %v273, 1
    %vm293 = vcmp.lt.s32.totalorder %v273, 2
    %vm294 = vcmp.lt.s32.totalorder %v273, 3
    %vm295 = vcmp.lt.s32.totalorder %v273, 4
    %v296 = vsel %vm292, %v276, %v279
    %v297 = vsel %vm295, %v285, 2102212464
    %v298 = vsel %vm294, %v282, %v297
    %v299 = vsel %vm293, %v296, %v298
    %v300 = vsel %vm292, %v279, %v282
    %v301 = vsel %vm295, %v288, 920167782
    %v302 = vsel %vm294, %v285, %v301
    %v303 = vsel %vm293, %v300, %v302
    %v304 = vsel %vm292, %v282, %v285
    %v305 = vsel %vm295, %v291, 1326507024
    %v306 = vsel %vm294, %v288, %v305
    %v307 = vsel %vm293, %v304, %v306
    %v308 = vshll.u32 %v268, 8
    %v309 = vmul.u32.u64.compose %v308, %v307
    %v310 = vextract.low.u32 %v309
    %v311 = vextract.high.u32 %v309
    %v312 = vmul.u32.u64.compose %v308, %v303
    %v313 = vextract.low.u32 %v312
    %v314 = vextract.high.u32 %v312
    %v315 = vmul.u32 %v308, %v299
    %v316 = vadd.s32 %v311, %v313
    %vm317 = vc.u32 %v311, %v313
    %v318 = vadd.s32 %v314, 1
    %v319 = vsel %vm317, %v318, %v314
    %v320 = vadd.s32 %v315, %v319
    %v321 = vadd.s32 %v320, 536870912
    %v322 = vshrl.u32 %v321, 30
    %v323 = vshll.u32 %v322, 30
    %v324 = vsub.s32 %v320, %v323
    %vm325 = vcmp.lt.s32.totalorder %v324, 0
    %v326 = vsub.s32 0, %v324
    %v327 = vsel %vm325, %v326, %v324
    %v328 = vclz %v327
    %v329 = vsub.s32 %v328, 2
    %vm330 = vcmp.gt.s32.totalorder 0, %v329
    %v331 = vsel %vm330, 0, %v329
    %v332 = vsub.s32 32, %v331
    %v333 = vshll.u32 %v324, %v331
    %v334 = vshrl.u32 %v316, %v332
    %v335 = vor.u32 %v333, %v334
    %v336 = vsub.s32 4294967266, %v331
    %v337 = vadd.s32 %v336, 127
    %v338 = vshll.u32 %v337, 23
    %v339 = vor.u32 4788187, %v338
    %v340 = vand.u32 2147483647, %v339
    %v342 = vcvt.s32.f32 %v335
    %v343 = vmul.f32 %v342, %v340
    %v344 = vxor.u32 %v343, 2147483648
    %v345 = vsel %vm262, %v344, %v343
    %v346 = vsub.s32 4, %v322
    %v347 = vsel %vm262, %v346, %v322
    %v348 = vsel %vm261, %v48, %v345
    %v349 = vsel %vm261, 0, %v347
    %v350 = vcosq.f32.pop %v348
    %v351 = vsinq.f32.pop %v348
    %vm352 = vweird.f32 %v48
    %v353 = vand.u32 %v349, 3
    %vm354 = vcmp.lt.s32.totalorder %v353, 2
    %vm355 = vcmp.eq.s32.totalorder %v353, 0
    %v356 = vxor.u32 %v351, 2147483648
    %v357 = vsel %vm355, %v350, %v356
    %vm358 = vcmp.eq.s32.totalorder %v353, 2
    %v359 = vxor.u32 %v350, 2147483648
    %v360 = vsel %vm358, %v359, %v351
    %v361 = vsel %vm354, %v357, %v360
    %v362 = vsel %vm352, nan, %v361
    %v363 = vand.u32 2147483647, %v49
    %vm364 = vcmp.le.f32.partialorder %v363, 0.7853982
    %vm365 = vcmp.lt.s32.totalorder %v49, 0
    %v366 = vand.u32 %v49, 2139095040
    %v367 = vshrl.u32 %v366, 23
    %v368 = vsub.s32 %v367, 127
    %v369 = vand.u32 2147483647, %v49
    %v370 = vand.u32 %v369, 8388607
    %v371 = vor.u32 %v370, 8388608
    %v372 = vsub.s32 0, %v371
    %v373 = vadd.s32 %v368, 1
    %vm374 = vcmp.gt.s32.totalorder %v373, 0
    %v375 = vsel %vm374, %v373, 0
    %v376 = vshrl.u32 %v375, 5
    %v377 = vand.u32 %v375, 31
    %v378 = vsub.s32 32, %v377
    %v379 = vshrl.u32 683565275, %v378
    %v380 = vshll.u32 683565275, %v377
    %v381 = vshrl.u32 2475754826, %v378
    %v382 = vor.u32 %v380, %v381
    %v383 = vshll.u32 2475754826, %v377
    %v384 = vshrl.u32 2131351028, %v378
    %v385 = vor.u32 %v383, %v384
    %v386 = vshll.u32 2131351028, %v377
    %v387 = vshrl.u32 2102212464, %v378
    %v388 = vor.u32 %v386, %v387
    %v389 = vshll.u32 2102212464, %v377
    %v390 = vshrl.u32 920167782, %v378
    %v391 = vor.u32 %v389, %v390
    %v392 = vshll.u32 920167782, %v377
    %v393 = vshrl.u32 1326507024, %v378
    %v394 = vor.u32 %v392, %v393
    %vm395 = vcmp.lt.s32.totalorder %v376, 1
    %vm396 = vcmp.lt.s32.totalorder %v376, 2
    %vm397 = vcmp.lt.s32.totalorder %v376, 3
    %vm398 = vcmp.lt.s32.totalorder %v376, 4
    %v399 = vsel %vm395, %v379, %v382
    %v400 = vsel %vm398, %v388, 2102212464
    %v401 = vsel %vm397, %v385, %v400
    %v402 = vsel %vm396, %v399, %v401
    %v403 = vsel %vm395, %v382, %v385
    %v404 = vsel %vm398, %v391, 920167782
    %v405 = vsel %vm397, %v388, %v404
    %v406 = vsel %vm396, %v403, %v405
    %v407 = vsel %vm395, %v385, %v388
    %v408 = vsel %vm398, %v394, 1326507024
    %v409 = vsel %vm397, %v391, %v408
    %v410 = vsel %vm396, %v407, %v409
    %v411 = vshll.u32 %v371, 8
    %v412 = vmul.u32.u64.compose %v411, %v410
    %v413 = vextract.low.u32 %v412
    %v414 = vextract.high.u32 %v412
    %v415 = vmul.u32.u64.compose %v411, %v406
    %v416 = vextract.low.u32 %v415
    %v417 = vextract.high.u32 %v415
    %v418 = vmul.u32 %v411, %v402
    %v419 = vadd.s32 %v414, %v416
    %vm420 = vc.u32 %v414, %v416
    %v421 = vadd.s32 %v417, 1
    %v422 = vsel %vm420, %v421, %v417
    %v423 = vadd.s32 %v418, %v422
    %v424 = vadd.s32 %v423, 536870912
    %v425 = vshrl.u32 %v424, 30
    %v426 = vshll.u32 %v425, 30
    %v427 = vsub.s32 %v423, %v426
    %vm428 = vcmp.lt.s32.totalorder %v427, 0
    %v429 = vsub.s32 0, %v427
    %v430 = vsel %vm428, %v429, %v427
    %v431 = vclz %v430
    %v432 = vsub.s32 %v431, 2
    %vm433 = vcmp.gt.s32.totalorder 0, %v432
    %v434 = vsel %vm433, 0, %v432
    %v435 = vsub.s32 32, %v434
    %v436 = vshll.u32 %v427, %v434
    %v437 = vshrl.u32 %v419, %v435
    %v438 = vor.u32 %v436, %v437
    %v439 = vsub.s32 4294967266, %v434
    %v440 = vadd.s32 %v439, 127
    %v441 = vshll.u32 %v440, 23
    %v442 = vor.u32 4788187, %v441
    %v443 = vand.u32 2147483647, %v442
    %v445 = vcvt.s32.f32 %v438
    %v446 = vmul.f32 %v445, %v443
    %v447 = vxor.u32 %v446, 2147483648
    %v448 = vsel %vm365, %v447, %v446
    %v449 = vsub.s32 4, %v425
    %v450 = vsel %vm365, %v449, %v425
    %v451 = vsel %vm364, %v49, %v448
    %v452 = vsel %vm364, 0, %v450
    %v453 = vcosq.f32.pop %v451
    %v454 = vsinq.f32.pop %v451
    %vm455 = vweird.f32 %v49
    %v456 = vand.u32 %v452, 3
    %vm457 = vcmp.lt.s32.totalorder %v456, 2
    %vm458 = vcmp.eq.s32.totalorder %v456, 0
    %v459 = vxor.u32 %v454, 2147483648
    %v460 = vsel %vm458, %v453, %v459
    %vm461 = vcmp.eq.s32.totalorder %v456, 2
    %v462 = vxor.u32 %v453, 2147483648
    %v463 = vsel %vm461, %v462, %v454
    %v464 = vsel %vm457, %v460, %v463
    %v465 = vsel %vm455, nan, %v464
    %v466 = vsel %vm50, %v155, %v362
    %v467 = vsel %vm51, %v259, %v465
    %v468 = vpack.c.bf16 %v466, %v466
    %v469 = vpack.c.bf16 %v467, %v467
    %v470 = vld [vmem:[#allocation2] sm:$0xff]
    %v471 = vld [vmem:[#allocation2 + $0x8] sm:$0xff]
    %v472 = vld [vmem:[#allocation2 + $0x10] sm:$0xff]
    %v473 = vld [vmem:[#allocation2 + $0x18] sm:$0xff]
    %v474 = vld [vmem:[#allocation2 + $0x20] sm:$0xff]
    %v475 = vld [vmem:[#allocation2 + $0x28] sm:$0xff]
    %v476 = vld [vmem:[#allocation2 + $0x30] sm:$0xff]
    %v477 = vld [vmem:[#allocation2 + $0x38] sm:$0xff]
    %v478 = vld [vmem:[#allocation2 + $0x40] sm:$0xff]
    %v479 = vld [vmem:[#allocation2 + $0x48] sm:$0xff]
    %v480 = vld [vmem:[#allocation2 + $0x50] sm:$0xff]
    %v481 = vld [vmem:[#allocation2 + $0x58] sm:$0xff]
    %v482 = vld [vmem:[#allocation2 + $0x60] sm:$0xff]
    %v483 = vld [vmem:[#allocation2 + $0x68] sm:$0xff]
    %v484 = vld [vmem:[#allocation2 + $0x70] sm:$0xff]
    %v485 = vld [vmem:[#allocation2 + $0x78] sm:$0xff]
    %v486 = vld [vmem:[#allocation2 + $0x80] sm:$0xff]
    %v487 = vld [vmem:[#allocation2 + $0x88] sm:$0xff]
    %v488 = vld [vmem:[#allocation2 + $0x90] sm:$0xff]
    %v489 = vld [vmem:[#allocation2 + $0x98] sm:$0xff]
    %v490 = vld [vmem:[#allocation2 + $0xa0] sm:$0xff]
    %v491 = vld [vmem:[#allocation2 + $0xa8] sm:$0xff]
    %v492 = vld [vmem:[#allocation2 + $0xb0] sm:$0xff]
    %v493 = vld [vmem:[#allocation2 + $0xb8] sm:$0xff]
    %v494 = vld [vmem:[#allocation2 + $0xc0] sm:$0xff]
    %v495 = vld [vmem:[#allocation2 + $0xc8] sm:$0xff]
    %v496 = vld [vmem:[#allocation2 + $0xd0] sm:$0xff]
    %v497 = vld [vmem:[#allocation2 + $0xd8] sm:$0xff]
    %v498 = vld [vmem:[#allocation2 + $0xe0] sm:$0xff]
    %v499 = vld [vmem:[#allocation2 + $0xe8] sm:$0xff]
    %v500 = vld [vmem:[#allocation2 + $0xf0] sm:$0xff]
    %v501 = vld [vmem:[#allocation2 + $0xf8] sm:$0xff]
    %v502 = vld [vmem:[%s1] sm:$0x3]
    %v504 = vlaneseq
    %v505 = vshrl.u32 %v504, 7
    %v506 = vsub.s32 0, %v505
    %v507 = vrot.slane %v502, %v506
    %v508 = vlaneseq
    %v509 = vshrl.u32 %v508, 7
    %v510 = vsub.s32 1, %v509
    %v511 = vrot.slane %v502, %v510
    %v546 = vunpack.c.l.b16 %v470
    %v547 = vunpack.c.h.b16 %v470
    %v548 = vunpack.c.l.b16 %v471
    %v549 = vunpack.c.h.b16 %v471
    %v550 = vunpack.c.l.b16 %v472
    %v551 = vunpack.c.h.b16 %v472
    %v552 = vunpack.c.l.b16 %v473
    %v553 = vunpack.c.h.b16 %v473
    %v554 = vunpack.c.l.b16 %v474
    %v555 = vunpack.c.h.b16 %v474
    %v556 = vunpack.c.l.b16 %v475
    %v557 = vunpack.c.h.b16 %v475
    %v558 = vunpack.c.l.b16 %v476
    %v559 = vunpack.c.h.b16 %v476
    %v560 = vunpack.c.l.b16 %v477
    %v561 = vunpack.c.h.b16 %v477
    %v562 = vunpack.c.l.b16 %v478
    %v563 = vunpack.c.h.b16 %v478
    %v564 = vunpack.c.l.b16 %v479
    %v565 = vunpack.c.h.b16 %v479
    %v566 = vunpack.c.l.b16 %v480
    %v567 = vunpack.c.h.b16 %v480
    %v568 = vunpack.c.l.b16 %v481
    %v569 = vunpack.c.h.b16 %v481
    %v570 = vunpack.c.l.b16 %v482
    %v571 = vunpack.c.h.b16 %v482
    %v572 = vunpack.c.l.b16 %v483
    %v573 = vunpack.c.h.b16 %v483
    %v574 = vunpack.c.l.b16 %v484
    %v575 = vunpack.c.h.b16 %v484
    %v576 = vunpack.c.l.b16 %v485
    %v577 = vunpack.c.h.b16 %v485
    %v578 = vunpack.c.l.b16 %v486
    %v579 = vunpack.c.h.b16 %v486
    %v580 = vunpack.c.l.b16 %v487
    %v581 = vunpack.c.h.b16 %v487
    %v582 = vunpack.c.l.b16 %v488
    %v583 = vunpack.c.h.b16 %v488
    %v584 = vunpack.c.l.b16 %v489
    %v585 = vunpack.c.h.b16 %v489
    %v586 = vunpack.c.l.b16 %v490
    %v587 = vunpack.c.h.b16 %v490
    %v588 = vunpack.c.l.b16 %v491
    %v589 = vunpack.c.h.b16 %v491
    %v590 = vunpack.c.l.b16 %v492
    %v591 = vunpack.c.h.b16 %v492
    %v592 = vunpack.c.l.b16 %v493
    %v593 = vunpack.c.h.b16 %v493
    %v594 = vunpack.c.l.b16 %v494
    %v595 = vunpack.c.h.b16 %v494
    %v596 = vunpack.c.l.b16 %v495
    %v597 = vunpack.c.h.b16 %v495
    %v598 = vunpack.c.l.b16 %v496
    %v599 = vunpack.c.h.b16 %v496
    %v600 = vunpack.c.l.b16 %v497
    %v601 = vunpack.c.h.b16 %v497
    %v602 = vunpack.c.l.b16 %v498
    %v603 = vunpack.c.h.b16 %v498
    %v604 = vunpack.c.l.b16 %v499
    %v605 = vunpack.c.h.b16 %v499
    %v606 = vunpack.c.l.b16 %v500
    %v607 = vunpack.c.h.b16 %v500
    %v608 = vunpack.c.l.b16 %v501
    %v609 = vunpack.c.h.b16 %v501
    %v610 = vpack.c.b16 %v548, %v546
    %v611 = vpack.c.b16 %v549, %v547
    %v612 = vpack.c.b16 %v552, %v550
    %v613 = vpack.c.b16 %v553, %v551
    %v614 = vpack.c.b16 %v556, %v554
    %v615 = vpack.c.b16 %v557, %v555
    %v616 = vpack.c.b16 %v560, %v558
    %v617 = vpack.c.b16 %v561, %v559
    %v618 = vpack.c.b16 %v564, %v562
    %v619 = vpack.c.b16 %v565, %v563
    %v620 = vpack.c.b16 %v568, %v566
    %v621 = vpack.c.b16 %v569, %v567
    %v622 = vpack.c.b16 %v572, %v570
    %v623 = vpack.c.b16 %v573, %v571
    %v624 = vpack.c.b16 %v576, %v574
    %v625 = vpack.c.b16 %v577, %v575
    %v626 = vpack.c.b16 %v580, %v578
    %v627 = vpack.c.b16 %v581, %v579
    %v628 = vpack.c.b16 %v584, %v582
    %v629 = vpack.c.b16 %v585, %v583
    %v630 = vpack.c.b16 %v588, %v586
    %v631 = vpack.c.b16 %v589, %v587
    %v632 = vpack.c.b16 %v592, %v590
    %v633 = vpack.c.b16 %v593, %v591
    %v634 = vpack.c.b16 %v596, %v594
    %v635 = vpack.c.b16 %v597, %v595
    %v636 = vpack.c.b16 %v600, %v598
    %v637 = vpack.c.b16 %v601, %v599
    %v638 = vpack.c.b16 %v604, %v602
    %v639 = vpack.c.b16 %v605, %v603
    %v640 = vpack.c.b16 %v608, %v606
    %v641 = vpack.c.b16 %v609, %v607
    %674 = vmatprep.subr.bf16.mxu0 %v611
    %675 = vmatpush1.bf16.msra.mxu0 %v610
    %676 = vmatprep.subr.bf16.mxu0 %v613
    %677 = vmatpush1.bf16.msra.mxu0 %v612
    %678 = vmatprep.subr.bf16.mxu0 %v615
    %679 = vmatpush1.bf16.msra.mxu0 %v614
    %680 = vmatprep.subr.bf16.mxu0 %v617
    %681 = vmatpush1.bf16.msra.mxu0 %v616
    %682 = vmatprep.subr.bf16.mxu0 %v619
    %683 = vmatpush1.bf16.msra.mxu0 %v618
    %684 = vmatprep.subr.bf16.mxu0 %v621
    %685 = vmatpush1.bf16.msra.mxu0 %v620
    %686 = vmatprep.subr.bf16.mxu0 %v623
    %687 = vmatpush1.bf16.msra.mxu0 %v622
    %688 = vmatprep.subr.bf16.mxu0 %v625
    %689 = vmatpush1.bf16.msra.mxu0 %v624
    %690 = vmatprep.subr.bf16.mxu0 %v627
    %691 = vmatpush1.bf16.msra.mxu0 %v626
    %692 = vmatprep.subr.bf16.mxu0 %v629
    %693 = vmatpush1.bf16.msra.mxu0 %v628
    %694 = vmatprep.subr.bf16.mxu0 %v631
    %695 = vmatpush1.bf16.msra.mxu0 %v630
    %696 = vmatprep.subr.bf16.mxu0 %v633
    %697 = vmatpush1.bf16.msra.mxu0 %v632
    %698 = vmatprep.subr.bf16.mxu0 %v635
    %699 = vmatpush1.bf16.msra.mxu0 %v634
    %700 = vmatprep.subr.bf16.mxu0 %v637
    %701 = vmatpush1.bf16.msra.mxu0 %v636
    %702 = vmatprep.subr.bf16.mxu0 %v639
    %703 = vmatpush1.bf16.msra.mxu0 %v638
    %704 = vmatprep.subr.bf16.mxu0 %v641
    %705 = vmatpush1.bf16.msra.mxu0 %v640
    %706 = vmatprep.mubr.bf16.mxu0 %v469
    %707 = vmatmul.mubr.bf16.gmra.mrb[0].mxu0 %v468
    %v708 = vpop.f32.mrb[0].mxu0
    %v709 = vadd.f32 %v507, %v708
    %v710 = vpop.f32.mrb[0].mxu0
    %v711 = vadd.f32 %v511, %v710
    %v712 = vpop.f32.mrb[0].mxu0
    %v713 = vpop.f32.mrb[0].mxu0
    %714 = vdwg.mxu0
    %715 = vst [vmem:[#allocation5] sm:$0xff] %v709
    %716 = vst [vmem:[#allocation5 + $0x8] sm:$0xff] %v711
    // Predicated region
    $region14: #{tpu_custom_call.1} parent=1 // pred_check
      _
    $region15: #{tpu_custom_call.1} parent=1 // pred_check_branch
      %718 = sbr.rel (0) target = $region17
    $region16: #{tpu_custom_call.1} parent=1 // pred_region
      %s720 = ssub.s32 256, 256
      %721 = vsyncadd [#allocation4], %s720
      %s723 = sshll.u32 [#allocation5], 4
      %s724 = int_to_ptr.vmem [resolvable:$true] %s723
      %726 = dma.vmem_to_hbm [thread:$0]  %s724, 256, %s2, [#allocation4]
    $region17: #{tpu_custom_call.1} parent=1 // pred_fallthru
      _
    // Predicated region
    $region18: #{tpu_custom_call.1} parent=1 // pred_check
      _
    $region19: #{tpu_custom_call.1} parent=1 // pred_check_branch
      %728 = sbr.rel (0) target = $region21
    $region20: #{tpu_custom_call.1} parent=1 // pred_region
      %729 = dma.done [#allocation4], 256
    $region21: #{tpu_custom_call.1} parent=1 // pred_fallthru
      _
    %730 = vsyncpa [#allocation3], 1
    %731 = vsyncpa [#allocation4], 1

</llo_original>
